<compile_context>
chip_gen: v5e
topology: v5e:2x2
jax: 0.10.0
libtpu: 0.0.40
codegen_flags: <defaults>
</compile_context>

<pallas_src>
import functools

import jax
import jax.numpy as jnp
from jax.experimental import pallas as pl
from jax.experimental.pallas import tpu as pltpu


# ------------------------------- kernel body --------------------------------

def _res_block_kernel(x_ref, w1_ref, b1_ref, w2_ref, b2_ref, o_ref,
                      *, wp, lb, cp, icp):
    """Fused residual block on Nb frames folded onto the lane axis.

    x_ref : (Cp, Lb)       Lb = Nb * P; each frame is a zero-padded (H+2)x(W+2)
                           grid flattened on lanes, with a >= wp+1 zero tail.
    w1_ref: (4*ICp, Cp)    rows [t*ICp, (t+1)*ICp) hold tap t = kh*2 + kw
    b1_ref: (ICp, 1)
    w2_ref: (4*Cp, ICp)
    b2_ref: (Cp, 1)
    o_ref : (Cp, Lb)       conv2 output + identity, same flat frame layout
                           (valid at frame position i*wp + j, i < H, j < W)
    """
    shifts = (0, 1, wp, wp + 1)

    def mish(v):
        # mish(v) = v * tanh(softplus(v)) = v * (1 - 2 / ((1 + e^v)^2 + 1))
        # One EUP exp + one divide; inf-safe in f32; mish(0) = 0 keeps padding valid.
        t = 1.0 + jnp.exp(v)
        return v - 2.0 * v / (t * t + 1.0)

    def conv2x2(a, w_ref, b_ref, rows):
        # 4 accumulating matmuls, one per tap; only one rolled view live at a time.
        y = jnp.dot(w_ref[pl.ds(0, rows), :], a,
                    preferred_element_type=jnp.float32)
        for t in range(1, 4):
            a_t = pltpu.roll(a, lb - shifts[t], axis=1)   # left lane shift by s_t
            y = y + jnp.dot(w_ref[pl.ds(t * rows, rows), :], a_t,
                            preferred_element_type=jnp.float32)
        return y + b_ref[...]

    x = x_ref[...].astype(jnp.float32)                    # (Cp, Lb)

    a1 = mish(x)
    y1 = conv2x2(a1, w1_ref, b1_ref, icp)                 # conv1 (pad already in frame)
    a2 = mish(y1)
    y2 = conv2x2(a2, w2_ref, b2_ref, cp)                  # conv2 (valid)

    # Identity: output frame position i*wp+j corresponds to padded-input
    # position (i+1)*wp+(j+1)  ->  left lane shift by wp+1.
    res = pltpu.roll(x, lb - (wp + 1), axis=1)

    o_ref[...] = (y2 + res).astype(o_ref.dtype)


# --------------------------- module forward pass ----------------------------

def _round_up(v, m):
    return (v + m - 1) // m * m


def _pick_nb(n, p, cp, icp):
    """Number of batch frames folded onto the lane axis per grid step."""
    per_lane = 4 * (4 * cp + 4 * icp)          # rough f32 working-set bytes / lane
    budget = 24 << 20                          # stay well inside scoped VMEM (v7x-safe)
    cap = max(1, min(budget // (per_lane * p), 64))
    if n >= 2:                                 # keep >= 2 grid steps for megacore
        cap = min(cap, (n + 1) // 2)
    for cand in range(min(cap, n), 0, -1):     # prefer an exact divisor of N
        if n % cand == 0:
            return cand
    return 1


@jax.jit
def residual_block_kn(x_nchw, w1, b1, w2, b2):
    """Forward of ResidualBlockKN.

    x_nchw: (N, C, H, W)
    w1:     (IC, C, 2, 2), b1: (IC,)   conv1, stride 1, padding (1,1)
    w2:     (C, IC, 2, 2), b2: (C,)    conv2, stride 1, padding (0,0)
    returns (N, C, H, W)
    """
    n, c, h, w = x_nchw.shape
    ic = w1.shape[0]
    dtype = x_nchw.dtype

    hp, wp = h + 2, w + 2                      # conv1 zero-padded frame
    pflat = hp * wp
    p = _round_up(pflat, 128)                  # lane-dense flat spatial axis
    if p - pflat < wp + 1:                     # zero tail guard for roll-built taps
        p += 128
    assert p - pflat >= wp + 1
    cp = _round_up(c, 8)                       # sublane-aligned channel counts
    icp = _round_up(ic, 8)

    nb = _pick_nb(n, p, cp, icp)               # frames per grid step
    lb = nb * p
    grid = (n // nb,)

    # ---- layout glue (in a stacked-block network this would be done once) ----
    xp = jnp.pad(x_nchw, ((0, 0), (0, cp - c), (1, 1), (1, 1)))      # (n,cp,hp,wp)
    x_flat = jnp.pad(xp.reshape(n, cp, pflat),
                     ((0, 0), (0, 0), (0, p - pflat)))               # (n,cp,p)
    x_lanes = jnp.transpose(x_flat, (1, 0, 2)).reshape(cp, n * p)    # (cp, n*p)

    # weights: (O, I, kh, kw) -> (4*Op, Ip), rows [t*Op,(t+1)*Op) hold tap t = kh*2+kw
    def pack_w(wgt, o, i, op, ip):
        wt = jnp.transpose(wgt, (2, 3, 0, 1)).reshape(4, o, i)
        wt = jnp.pad(wt, ((0, 0), (0, op - o), (0, ip - i)))
        return wt.reshape(4 * op, ip).astype(jnp.float32)

    w1_p = pack_w(w1, ic, c, icp, cp)
    w2_p = pack_w(w2, c, ic, cp, icp)
    b1_p = jnp.pad(b1, (0, icp - ic)).reshape(icp, 1).astype(jnp.float32)
    b2_p = jnp.pad(b2, (0, cp - c)).reshape(cp, 1).astype(jnp.float32)

    # Explicit VMEM sizing: in/out blocks double-buffered + f32 intermediates.
    blk_bytes = cp * lb * 4
    work_bytes = 4 * (cp + icp) * lb * 4
    vmem_limit = int(min(max(4 * blk_bytes + work_bytes + (2 << 20), 32 << 20),
                         64 << 20))

    kernel = functools.partial(_res_block_kernel, wp=wp, lb=lb, cp=cp, icp=icp)

    out_full = pl.pallas_call(
        kernel,
        out_shape=jax.ShapeDtypeStruct((cp, n * p), dtype),
        grid_spec=pltpu.PrefetchScalarGridSpec(
            num_scalar_prefetch=0,
            grid=grid,
            in_specs=[
                pl.BlockSpec((cp, lb), lambda i: (0, i)),
                pl.BlockSpec((4 * icp, cp), lambda i: (0, 0)),
                pl.BlockSpec((icp, 1), lambda i: (0, 0)),
                pl.BlockSpec((4 * cp, icp), lambda i: (0, 0)),
                pl.BlockSpec((cp, 1), lambda i: (0, 0)),
            ],
            out_specs=pl.BlockSpec((cp, lb), lambda i: (0, i)),
        ),
        compiler_params=pltpu.CompilerParams(
            dimension_semantics=("parallel",),
            vmem_limit_bytes=vmem_limit),
    )(x_lanes, w1_p, b1_p, w2_p, b2_p)

    # ---- drop channel / frame padding: valid output at frame (i, j), i<H, j<W ----
    out_nf = jnp.transpose(out_full.reshape(cp, n, p), (1, 0, 2))    # (n,cp,p)
    out = out_nf[:, :c, :pflat].reshape(n, c, hp, wp)[:, :, :h, :w]
    return out


# ------------------------------ JAX reference --------------------------------

def _reference(x_nchw, w1, b1, w2, b2):
    def mish(x):
        sp = jnp.maximum(x, 0.0) + jnp.log1p(jnp.exp(-jnp.abs(x)))
        return x * jnp.tanh(sp)

    def conv(x, wgt, b, pad):
        y = jax.lax.conv_general_dilated(
            x, wgt, window_strides=(1, 1),
            padding=[(pad, pad), (pad, pad)],
            dimension_numbers=("NCHW", "OIHW", "NCHW"))
        return y + b[None, :, None, None]

    out = mish(x_nchw)
    out = conv(out, w1, b1, 1)
    out = mish(out)
    out = conv(out, w2, b2, 0)
    return out + x_nchw


# ---------------------------------- main -------------------------------------

if __name__ == "__main__":
    key = jax.random.PRNGKey(0)
    k_x, k_w1, k_b1, k_w2, k_b2 = jax.random.split(key, 5)

    N, C, H, W = 2, 4, 16, 16
    IC = 8  # inter_channels

    x = jax.random.normal(k_x, (N, C, H, W), jnp.float32)
    w1 = jax.random.normal(k_w1, (IC, C, 2, 2), jnp.float32) / jnp.sqrt(4.0 * C)
    b1 = 0.1 * jax.random.normal(k_b1, (IC,), jnp.float32)
    w2 = jax.random.normal(k_w2, (C, IC, 2, 2), jnp.float32) / jnp.sqrt(4.0 * IC)
    b2 = 0.1 * jax.random.normal(k_b2, (C,), jnp.float32)

    out = jax.block_until_ready(residual_block_kn(x, w1, b1, w2, b2))

    ref = _reference(x, w1, b1, w2, b2)
    assert out.shape == (N, C, H, W), out.shape
    max_err = float(jnp.max(jnp.abs(out - ref)))
    assert jnp.allclose(out, ref, atol=2e-4, rtol=2e-4), max_err

    print("KERNEL_OK")
</pallas_src>

<mosaic_0001>
module attributes {stable_mosaic.version = 11 : i64} {
  func.func @_res_block_kernel(%arg0: i32, %arg1: memref<8x384xf32, #tpu.memory_space<vmem>>, %arg2: memref<32x8xf32, #tpu.memory_space<vmem>>, %arg3: memref<8x1xf32, #tpu.memory_space<vmem>>, %arg4: memref<32x8xf32, #tpu.memory_space<vmem>>, %arg5: memref<8x1xf32, #tpu.memory_space<vmem>>, %arg6: memref<8x384xf32, #tpu.memory_space<vmem>>) attributes {dimension_semantics = [#tpu.dimension_semantics<parallel>], iteration_bounds = array<i64: 2>, scalar_prefetch = 0 : i64, scratch_operands = 0 : i64, tpu.core_type = #tpu.core_type<tc>, window_params = [{transform_indices = @transform_0, window_bounds = array<i64: 8, 384>}, {pipeline_mode = #tpu.pipeline_mode<synchronous>, transform_indices = @transform_1, window_bounds = array<i64: 32, 8>}, {pipeline_mode = #tpu.pipeline_mode<synchronous>, transform_indices = @transform_2, window_bounds = array<i64: 8, 1>}, {pipeline_mode = #tpu.pipeline_mode<synchronous>, transform_indices = @transform_3, window_bounds = array<i64: 32, 8>}, {pipeline_mode = #tpu.pipeline_mode<synchronous>, transform_indices = @transform_4, window_bounds = array<i64: 8, 1>}, {transform_indices = @transform_5, window_bounds = array<i64: 8, 384>}]} {
    %c0 = arith.constant 0 : index
    %c0_0 = arith.constant 0 : index
    %0 = vector.load %arg1[%c0, %c0_0] : memref<8x384xf32, #tpu.memory_space<vmem>>, vector<8x384xf32>
    %1 = math.exp %0 : vector<8x384xf32>
    %cst = arith.constant 1.000000e+00 : f32
    %2 = vector.broadcast %cst : f32 to vector<8x384xf32>
    %3 = arith.addf %2, %1 : vector<8x384xf32>
    %cst_1 = arith.constant 2.000000e+00 : f32
    %4 = vector.broadcast %cst_1 : f32 to vector<8x384xf32>
    %5 = arith.mulf %4, %0 : vector<8x384xf32>
    %6 = arith.mulf %3, %3 : vector<8x384xf32>
    %cst_2 = arith.constant 1.000000e+00 : f32
    %7 = vector.broadcast %cst_2 : f32 to vector<8x384xf32>
    %8 = arith.addf %6, %7 : vector<8x384xf32>
    %9 = arith.divf %5, %8 : vector<8x384xf32>
    %10 = arith.subf %0, %9 : vector<8x384xf32>
    %c0_3 = arith.constant 0 : index
    %c0_4 = arith.constant 0 : index
    %11 = vector.load %arg2[%c0_3, %c0_4] : memref<32x8xf32, #tpu.memory_space<vmem>>, vector<8x8xf32>
    %cst_5 = arith.constant dense<0.000000e+00> : vector<8x384xf32>
    %12 = tpu.matmul %11, %10, %cst_5 {dimension_numbers = #tpu.dot_dimension_numbers<[1], [0], [0], [1], [0, 0, 1, 1], [], []>} : vector<8x8xf32>, vector<8x384xf32>, vector<8x384xf32> -> vector<8x384xf32>
    %c383_i32 = arith.constant 383 : i32
    %13 = tpu.dynamic_rotate %10 by %c383_i32 dim 1 : vector<8x384xf32>, i32 -> vector<8x384xf32>
    %c8 = arith.constant 8 : index
    %c0_6 = arith.constant 0 : index
    %14 = vector.load %arg2[%c8, %c0_6] : memref<32x8xf32, #tpu.memory_space<vmem>>, vector<8x8xf32>
    %cst_7 = arith.constant dense<0.000000e+00> : vector<8x384xf32>
    %15 = tpu.matmul %14, %13, %cst_7 {dimension_numbers = #tpu.dot_dimension_numbers<[1], [0], [0], [1], [0, 0, 1, 1], [], []>} : vector<8x8xf32>, vector<8x384xf32>, vector<8x384xf32> -> vector<8x384xf32>
    %16 = arith.addf %12, %15 : vector<8x384xf32>
    %c366_i32 = arith.constant 366 : i32
    %17 = tpu.dynamic_rotate %10 by %c366_i32 dim 1 : vector<8x384xf32>, i32 -> vector<8x384xf32>
    %c16 = arith.constant 16 : index
    %c0_8 = arith.constant 0 : index
    %18 = vector.load %arg2[%c16, %c0_8] : memref<32x8xf32, #tpu.memory_space<vmem>>, vector<8x8xf32>
    %cst_9 = arith.constant dense<0.000000e+00> : vector<8x384xf32>
    %19 = tpu.matmul %18, %17, %cst_9 {dimension_numbers = #tpu.dot_dimension_numbers<[1], [0], [0], [1], [0, 0, 1, 1], [], []>} : vector<8x8xf32>, vector<8x384xf32>, vector<8x384xf32> -> vector<8x384xf32>
    %20 = arith.addf %16, %19 : vector<8x384xf32>
    %c365_i32 = arith.constant 365 : i32
    %21 = tpu.dynamic_rotate %10 by %c365_i32 dim 1 : vector<8x384xf32>, i32 -> vector<8x384xf32>
    %c24 = arith.constant 24 : index
    %c0_10 = arith.constant 0 : index
    %22 = vector.load %arg2[%c24, %c0_10] : memref<32x8xf32, #tpu.memory_space<vmem>>, vector<8x8xf32>
    %cst_11 = arith.constant dense<0.000000e+00> : vector<8x384xf32>
    %23 = tpu.matmul %22, %21, %cst_11 {dimension_numbers = #tpu.dot_dimension_numbers<[1], [0], [0], [1], [0, 0, 1, 1], [], []>} : vector<8x8xf32>, vector<8x384xf32>, vector<8x384xf32> -> vector<8x384xf32>
    %24 = arith.addf %20, %23 : vector<8x384xf32>
    %c0_12 = arith.constant 0 : index
    %c0_13 = arith.constant 0 : index
    %25 = vector.load %arg3[%c0_12, %c0_13] : memref<8x1xf32, #tpu.memory_space<vmem>>, vector<8x1xf32>
    %26 = vector.broadcast %25 : vector<8x1xf32> to vector<8x384xf32>
    %27 = arith.addf %24, %26 : vector<8x384xf32>
    %28 = math.exp %27 : vector<8x384xf32>
    %cst_14 = arith.constant 1.000000e+00 : f32
    %29 = vector.broadcast %cst_14 : f32 to vector<8x384xf32>
    %30 = arith.addf %29, %28 : vector<8x384xf32>
    %cst_15 = arith.constant 2.000000e+00 : f32
    %31 = vector.broadcast %cst_15 : f32 to vector<8x384xf32>
    %32 = arith.mulf %31, %27 : vector<8x384xf32>
    %33 = arith.mulf %30, %30 : vector<8x384xf32>
    %cst_16 = arith.constant 1.000000e+00 : f32
    %34 = vector.broadcast %cst_16 : f32 to vector<8x384xf32>
    %35 = arith.addf %33, %34 : vector<8x384xf32>
    %36 = arith.divf %32, %35 : vector<8x384xf32>
    %37 = arith.subf %27, %36 : vector<8x384xf32>
    %c0_17 = arith.constant 0 : index
    %c0_18 = arith.constant 0 : index
    %38 = vector.load %arg4[%c0_17, %c0_18] : memref<32x8xf32, #tpu.memory_space<vmem>>, vector<8x8xf32>
    %cst_19 = arith.constant dense<0.000000e+00> : vector<8x384xf32>
    %39 = tpu.matmul %38, %37, %cst_19 {dimension_numbers = #tpu.dot_dimension_numbers<[1], [0], [0], [1], [0, 0, 1, 1], [], []>} : vector<8x8xf32>, vector<8x384xf32>, vector<8x384xf32> -> vector<8x384xf32>
    %c383_i32_20 = arith.constant 383 : i32
    %40 = tpu.dynamic_rotate %37 by %c383_i32_20 dim 1 : vector<8x384xf32>, i32 -> vector<8x384xf32>
    %c8_21 = arith.constant 8 : index
    %c0_22 = arith.constant 0 : index
    %41 = vector.load %arg4[%c8_21, %c0_22] : memref<32x8xf32, #tpu.memory_space<vmem>>, vector<8x8xf32>
    %cst_23 = arith.constant dense<0.000000e+00> : vector<8x384xf32>
    %42 = tpu.matmul %41, %40, %cst_23 {dimension_numbers = #tpu.dot_dimension_numbers<[1], [0], [0], [1], [0, 0, 1, 1], [], []>} : vector<8x8xf32>, vector<8x384xf32>, vector<8x384xf32> -> vector<8x384xf32>
    %43 = arith.addf %39, %42 : vector<8x384xf32>
    %c366_i32_24 = arith.constant 366 : i32
    %44 = tpu.dynamic_rotate %37 by %c366_i32_24 dim 1 : vector<8x384xf32>, i32 -> vector<8x384xf32>
    %c16_25 = arith.constant 16 : index
    %c0_26 = arith.constant 0 : index
    %45 = vector.load %arg4[%c16_25, %c0_26] : memref<32x8xf32, #tpu.memory_space<vmem>>, vector<8x8xf32>
    %cst_27 = arith.constant dense<0.000000e+00> : vector<8x384xf32>
    %46 = tpu.matmul %45, %44, %cst_27 {dimension_numbers = #tpu.dot_dimension_numbers<[1], [0], [0], [1], [0, 0, 1, 1], [], []>} : vector<8x8xf32>, vector<8x384xf32>, vector<8x384xf32> -> vector<8x384xf32>
    %47 = arith.addf %43, %46 : vector<8x384xf32>
    %c365_i32_28 = arith.constant 365 : i32
    %48 = tpu.dynamic_rotate %37 by %c365_i32_28 dim 1 : vector<8x384xf32>, i32 -> vector<8x384xf32>
    %c24_29 = arith.constant 24 : index
    %c0_30 = arith.constant 0 : index
    %49 = vector.load %arg4[%c24_29, %c0_30] : memref<32x8xf32, #tpu.memory_space<vmem>>, vector<8x8xf32>
    %cst_31 = arith.constant dense<0.000000e+00> : vector<8x384xf32>
    %50 = tpu.matmul %49, %48, %cst_31 {dimension_numbers = #tpu.dot_dimension_numbers<[1], [0], [0], [1], [0, 0, 1, 1], [], []>} : vector<8x8xf32>, vector<8x384xf32>, vector<8x384xf32> -> vector<8x384xf32>
    %51 = arith.addf %47, %50 : vector<8x384xf32>
    %c0_32 = arith.constant 0 : index
    %c0_33 = arith.constant 0 : index
    %52 = vector.load %arg5[%c0_32, %c0_33] : memref<8x1xf32, #tpu.memory_space<vmem>>, vector<8x1xf32>
    %53 = vector.broadcast %52 : vector<8x1xf32> to vector<8x384xf32>
    %54 = arith.addf %51, %53 : vector<8x384xf32>
    %c365_i32_34 = arith.constant 365 : i32
    %55 = tpu.dynamic_rotate %0 by %c365_i32_34 dim 1 : vector<8x384xf32>, i32 -> vector<8x384xf32>
    %56 = arith.addf %54, %55 : vector<8x384xf32>
    %c0_35 = arith.constant 0 : index
    %c0_36 = arith.constant 0 : index
    %57 = vector.load %arg6[%c0_35, %c0_36] : memref<8x384xf32, #tpu.memory_space<vmem>>, vector<8x384xf32>
    tpu.vector_store %arg6[%c0_35, %c0_36], %56 {strides = array<i32>} : memref<8x384xf32, #tpu.memory_space<vmem>>, vector<8x384xf32>,
    return
  }
  func.func @transform_0(%arg0: i32) -> (i32, i32) {
    %c0_i32 = arith.constant 0 : i32
    %c0_i32_0 = arith.constant 0 : i32
    return %c0_i32, %arg0 : i32, i32
  }
  func.func @transform_1(%arg0: i32) -> (i32, i32) {
    %c0_i32 = arith.constant 0 : i32
    %c0_i32_0 = arith.constant 0 : i32
    %c0_i32_1 = arith.constant 0 : i32
    return %c0_i32, %c0_i32_0 : i32, i32
  }
  func.func @transform_2(%arg0: i32) -> (i32, i32) {
    %c0_i32 = arith.constant 0 : i32
    %c0_i32_0 = arith.constant 0 : i32
    %c0_i32_1 = arith.constant 0 : i32
    return %c0_i32, %c0_i32_0 : i32, i32
  }
  func.func @transform_3(%arg0: i32) -> (i32, i32) {
    %c0_i32 = arith.constant 0 : i32
    %c0_i32_0 = arith.constant 0 : i32
    %c0_i32_1 = arith.constant 0 : i32
    return %c0_i32, %c0_i32_0 : i32, i32
  }
  func.func @transform_4(%arg0: i32) -> (i32, i32) {
    %c0_i32 = arith.constant 0 : i32
    %c0_i32_0 = arith.constant 0 : i32
    %c0_i32_1 = arith.constant 0 : i32
    return %c0_i32, %c0_i32_0 : i32, i32
  }
  func.func @transform_5(%arg0: i32) -> (i32, i32) {
    %c0_i32 = arith.constant 0 : i32
    %c0_i32_0 = arith.constant 0 : i32
    return %c0_i32, %arg0 : i32, i32
  }
}

</mosaic_0001>

<llo_original>
// kernel: residual_block_kn.1
$region0: #{residual_block_kn.1}
  #allocation0 [shape = 'u32[]', space=smem, size = 0x4, offset = 0x4, fixed_abs, tag = 'smem constant byte address 0x4 - core index']
  #allocation1 [shape = 'u32[72,128]{1,0:T(1,128)}', space=vmem, size = 0x9000, scoped, tag = 'internal scratch']
  %s0 = inlined_call_operand.vmem [shape: f32[8,768], index: 0, kind: input, shape index: {}]
  %s1 = inlined_call_operand.vmem [shape: f32[32,8], index: 1, kind: input, shape index: {}]
  %s2 = inlined_call_operand.vmem [shape: f32[8,1], index: 2, kind: input, shape index: {}]
  %s3 = inlined_call_operand.vmem [shape: f32[32,8], index: 3, kind: input, shape index: {}]
  %s4 = inlined_call_operand.vmem [shape: f32[8,1], index: 4, kind: input, shape index: {}]
  %s5 = inlined_call_operand.vmem [shape: f32[8,768], index: 5, kind: output, shape index: {}]
  %s6 = sld [smem:[#allocation0]]
  $region53: #{residual_block_kn.1} parent=0
    _
  %s8 = ssub.s32 1, %s6
  %s9 = scalar_select 0, %s8, %s6
  loop: start=0, step=1, limit=4
  $region2: #{residual_block_kn.1} parent=0 // loop_pre_header
    _
  $region3: #{residual_block_kn.1} parent=0 // loop_header
    %s11 = sphi 0, %s15
    %p12 = scmp.ge.s32.totalorder %s11, 4
    %s21 = sphi 0, %s23
    %s24 = sphi 0, %s21
    %s25 = sphi 0, %s24
    %s41 = sphi 0, %s25
    %s45 = sphi 0, %s45
    %s47 = sphi 0, %s45
    %s48 = sphi 0, %s47
    %s62 = sphi 0, %s48
    %s66 = sphi 0, %s66
    %s68 = sphi 0, %s66
    %s69 = sphi 0, %s68
    %s83 = sphi 0, %s69
    %s87 = sphi 0, %s87
    %s89 = sphi 0, %s87
    %s90 = sphi 0, %s89
    %s104 = sphi 0, %s90
    %s108 = sphi 0, %s108
    %s110 = sphi 0, %s108
    %s111 = sphi 0, %s110
    %s125 = sphi 0, %s111
    %s131 = sphi 0, %s133
    %s134 = sphi 0, %s131
    %s135 = sphi 0, %s134
    %s151 = sphi 0, %s135
  $region4: #{residual_block_kn.1} parent=0 // loop_header_branch
    %14 = sbr.rel (%p12) target = $region8
  $region5: #{residual_block_kn.1} parent=0 // loop_body
    %s16 = ssub.s32 %s11, 1
    %s17 = ssub.s32 %s11, 2
    %s18 = sadd.s32 %s11, 1
    %s19 = ssub.s32 %s11, %s18
    %p20 = scmp.eq.s32.totalorder %s19, 0
    %s22 = sadd.s32 %s21, 1
    %s23 = scalar_select %p20, %s21, %s22
    %p26 = pneg %p20
    %p27 = scmp.eq.s32.totalorder %s11, 1
    %p28 = por %p26, %p27
    %p29 = scmp.ne.s32.totalorder %s21, %s24
    %p30 = scmp.eq.s32.totalorder %s11, 0
    %p31 = por %p29, %p30
    %p32 = scmp.ne.s32.totalorder %s21, %s24
    %p33 = scmp.eq.s32.totalorder %s16, 1
    %p34 = por %p32, %p33
    %p35 = scmp.ne.s32.totalorder %s24, %s25
    %p36 = scmp.eq.s32.totalorder %s16, 0
    %p37 = por %p35, %p36
    %p38 = scmp.ne.s32.totalorder %s24, %s25
    %p39 = scmp.eq.s32.totalorder %s17, 1
    %p40 = por %p38, %p39
    %p42 = scmp.ne.s32.totalorder %s25, %s41
    %p43 = scmp.eq.s32.totalorder %s17, 0
    %p44 = por %p42, %p43
    %s46 = sadd.s32 %s45, 1
    %p49 = scmp.eq.s32.totalorder %s11, 1
    %p50 = scmp.ne.s32.totalorder %s45, %s47
    %p51 = scmp.eq.s32.totalorder %s11, 0
    %p52 = por %p50, %p51
    %p53 = scmp.ne.s32.totalorder %s45, %s47
    %p54 = scmp.eq.s32.totalorder %s16, 1
    %p55 = por %p53, %p54
    %p56 = scmp.ne.s32.totalorder %s47, %s48
    %p57 = scmp.eq.s32.totalorder %s16, 0
    %p58 = por %p56, %p57
    %p59 = scmp.ne.s32.totalorder %s47, %s48
    %p60 = scmp.eq.s32.totalorder %s17, 1
    %p61 = por %p59, %p60
    %p63 = scmp.ne.s32.totalorder %s48, %s62
    %p64 = scmp.eq.s32.totalorder %s17, 0
    %p65 = por %p63, %p64
    %s67 = sadd.s32 %s66, 1
    %p70 = scmp.eq.s32.totalorder %s11, 1
    %p71 = scmp.ne.s32.totalorder %s66, %s68
    %p72 = scmp.eq.s32.totalorder %s11, 0
    %p73 = por %p71, %p72
    %p74 = scmp.ne.s32.totalorder %s66, %s68
    %p75 = scmp.eq.s32.totalorder %s16, 1
    %p76 = por %p74, %p75
    %p77 = scmp.ne.s32.totalorder %s68, %s69
    %p78 = scmp.eq.s32.totalorder %s16, 0
    %p79 = por %p77, %p78
    %p80 = scmp.ne.s32.totalorder %s68, %s69
    %p81 = scmp.eq.s32.totalorder %s17, 1
    %p82 = por %p80, %p81
    %p84 = scmp.ne.s32.totalorder %s69, %s83
    %p85 = scmp.eq.s32.totalorder %s17, 0
    %p86 = por %p84, %p85
    %s88 = sadd.s32 %s87, 1
    %p91 = scmp.eq.s32.totalorder %s11, 1
    %p92 = scmp.ne.s32.totalorder %s87, %s89
    %p93 = scmp.eq.s32.totalorder %s11, 0
    %p94 = por %p92, %p93
    %p95 = scmp.ne.s32.totalorder %s87, %s89
    %p96 = scmp.eq.s32.totalorder %s16, 1
    %p97 = por %p95, %p96
    %p98 = scmp.ne.s32.totalorder %s89, %s90
    %p99 = scmp.eq.s32.totalorder %s16, 0
    %p100 = por %p98, %p99
    %p101 = scmp.ne.s32.totalorder %s89, %s90
    %p102 = scmp.eq.s32.totalorder %s17, 1
    %p103 = por %p101, %p102
    %p105 = scmp.ne.s32.totalorder %s90, %s104
    %p106 = scmp.eq.s32.totalorder %s17, 0
    %p107 = por %p105, %p106
    %s109 = sadd.s32 %s108, 1
    %p112 = scmp.eq.s32.totalorder %s11, 1
    %p113 = scmp.ne.s32.totalorder %s108, %s110
    %p114 = scmp.eq.s32.totalorder %s11, 0
    %p115 = por %p113, %p114
    %p116 = scmp.ne.s32.totalorder %s108, %s110
    %p117 = scmp.eq.s32.totalorder %s16, 1
    %p118 = por %p116, %p117
    %p119 = scmp.ne.s32.totalorder %s110, %s111
    %p120 = scmp.eq.s32.totalorder %s16, 0
    %p121 = por %p119, %p120
    %p122 = scmp.ne.s32.totalorder %s110, %s111
    %p123 = scmp.eq.s32.totalorder %s17, 1
    %p124 = por %p122, %p123
    %p126 = scmp.ne.s32.totalorder %s111, %s125
    %p127 = scmp.eq.s32.totalorder %s17, 0
    %p128 = por %p126, %p127
    %s129 = ssub.s32 %s11, %s18
    %p130 = scmp.eq.s32.totalorder %s129, 0
    %s132 = sadd.s32 %s131, 1
    %s133 = scalar_select %p130, %s131, %s132
    %p136 = pneg %p130
    %p137 = scmp.eq.s32.totalorder %s11, 1
    %p138 = por %p136, %p137
    %p139 = scmp.ne.s32.totalorder %s131, %s134
    %p140 = scmp.eq.s32.totalorder %s11, 0
    %p141 = por %p139, %p140
    %p142 = scmp.ne.s32.totalorder %s131, %s134
    %p143 = scmp.eq.s32.totalorder %s16, 1
    %p144 = por %p142, %p143
    %p145 = scmp.ne.s32.totalorder %s134, %s135
    %p146 = scmp.eq.s32.totalorder %s16, 0
    %p147 = por %p145, %p146
    %p148 = scmp.ne.s32.totalorder %s134, %s135
    %p149 = scmp.eq.s32.totalorder %s17, 1
    %p150 = por %p148, %p149
    %p152 = scmp.ne.s32.totalorder %s135, %s151
    %p153 = scmp.eq.s32.totalorder %s17, 0
    %p154 = por %p152, %p153
    %p155 = scmp.le.s32.totalorder 1, %s11
    %p156 = scmp.lt.s32.totalorder %s11, 3
    %p157 = pnand %p155, %p156
    %p158 = pneg %p157
    // Predicated region
    $region9: #{residual_block_kn.1} parent=5 // pred_check
      _
    $region10: #{residual_block_kn.1} parent=5 // pred_check_branch
      %160 = sbr.rel (%p157) target = $region12
    $region11: #{residual_block_kn.1} parent=5 // pred_region
      %s161 = ssub.s32 %s11, 1
      // Predicated region
      $region13: #{residual_block_kn.1} parent=11 // pred_check
        %p162 = pneg %p58
      $region14: #{residual_block_kn.1} parent=11 // pred_check_branch
        %164 = sbr.rel (%p162) target = $region16
      $region15: #{residual_block_kn.1} parent=11 // pred_region
        _
      $region16: #{residual_block_kn.1} parent=11 // pred_fallthru
        _
      // Predicated region
      $region17: #{residual_block_kn.1} parent=11 // pred_check
        %p165 = pneg %p79
      $region18: #{residual_block_kn.1} parent=11 // pred_check_branch
        %167 = sbr.rel (%p165) target = $region20
      $region19: #{residual_block_kn.1} parent=11 // pred_region
        _
      $region20: #{residual_block_kn.1} parent=11 // pred_fallthru
        _
      // Predicated region
      $region21: #{residual_block_kn.1} parent=11 // pred_check
        %p168 = pneg %p100
      $region22: #{residual_block_kn.1} parent=11 // pred_check_branch
        %170 = sbr.rel (%p168) target = $region24
      $region23: #{residual_block_kn.1} parent=11 // pred_region
        _
      $region24: #{residual_block_kn.1} parent=11 // pred_fallthru
        _
      // Predicated region
      $region25: #{residual_block_kn.1} parent=11 // pred_check
        %p171 = pneg %p121
      $region26: #{residual_block_kn.1} parent=11 // pred_check_branch
        %173 = sbr.rel (%p171) target = $region28
      $region27: #{residual_block_kn.1} parent=11 // pred_region
        _
      $region28: #{residual_block_kn.1} parent=11 // pred_fallthru
        _
    $region12: #{residual_block_kn.1} parent=5 // pred_fallthru
      _
    %p174 = scmp.lt.s32.totalorder %s11, 2
    // Predicated region
    $region29: #{residual_block_kn.1} parent=5 // pred_check
      %p175 = pneg %p174
    $region30: #{residual_block_kn.1} parent=5 // pred_check_branch
      %177 = sbr.rel (%p175) target = $region32
    $region31: #{residual_block_kn.1} parent=5 // pred_region
      // Predicated region
      $region33: #{residual_block_kn.1} parent=31 // pred_check
        %p178 = pneg %p31
      $region34: #{residual_block_kn.1} parent=31 // pred_check_branch
        %180 = sbr.rel (%p178) target = $region36
      $region35: #{residual_block_kn.1} parent=31 // pred_region
        %s181 = smul.u32 3, %s11
        %p182 = scmp.lt.s32.totalorder %s181, 5
        %s183 = scalar_select %p182, %s181, 5
        %s184 = smul.addr %s183, 8
        %s185 = scalar_lea.vmem %s0, %s184
        %s186 = smul.u32 3, %s11
      $region36: #{residual_block_kn.1} parent=31 // pred_fallthru
        _
    $region32: #{residual_block_kn.1} parent=5 // pred_fallthru
      _
    %p187 = scmp.le.s32.totalorder 1, %s11
    %p188 = scmp.lt.s32.totalorder %s11, 3
    %p189 = pnand %p187, %p188
    %p190 = pneg %p189
    // Predicated region
    $region37: #{residual_block_kn.1} parent=5 // pred_check
      _
    $region38: #{residual_block_kn.1} parent=5 // pred_check_branch
      %192 = sbr.rel (%p189) target = $region40
    $region39: #{residual_block_kn.1} parent=5 // pred_region
      %s193 = ssub.s32 %s11, 1
      %s194 = smul.u32 3, %s16
      %p195 = scmp.lt.s32.totalorder %s194, 5
      %s196 = scalar_select %p195, %s194, 5
      %s197 = smul.addr %s196, 8
      %s198 = scalar_lea.vmem %s0, %s197
      %p199 = pneg %p37
      %p200 = pneg %p34
      %p201 = pneg %p58
      %p202 = pneg %p55
      %p203 = pneg %p79
      %p204 = pneg %p76
      %p205 = pneg %p100
      %p206 = pneg %p97
      %p207 = pneg %p121
      %p208 = pneg %p118
      %p209 = pneg %p147
      %p210 = pneg %p144
      %s211 = smul.u32 3, %s16
      %p212 = scmp.lt.s32.totalorder %s211, 5
      %s213 = scalar_select %p212, %s211, 5
      %s214 = smul.addr %s213, 8
      %s215 = scalar_lea.vmem %s5, %s214
      %s216 = smul.u32 3, %s16
      %p217 = scmp.lt.s32.totalorder %s216, 5
      %s218 = scalar_select %p217, %s216, 5
      %s219 = smul.addr %s218, 8
      %s220 = scalar_lea.vmem %s0, %s219
      %s221 = smul.u32 3, %s16
      %s222 = smul.u32 3, %s16
      %p223 = scmp.lt.s32.totalorder %s222, 5
      %s224 = scalar_select %p223, %s222, 5
      %s225 = smul.addr %s224, 8
      %s226 = scalar_lea.vmem %s5, %s225
      %s227 = smul.u32 3, %s16
      %v228 = vld [vmem:[%s220] sm:$0xff]
      %v229 = vld [vmem:[%s220 + $0x8] sm:$0xff]
      %v230 = vld [vmem:[%s220 + $0x10] sm:$0xff]
      %v231 = vmul.f32 %v228, 1.442695
      %v232 = vpow.pop %v231
      %v233 = vmul.f32 %v229, 1.442695
      %v234 = vpow.pop %v233
      %v235 = vmul.f32 %v230, 1.442695
      %v236 = vpow.pop %v235
      %v237 = vadd.f32 %v232, 1.0
      %v238 = vadd.f32 %v234, 1.0
      %v239 = vadd.f32 %v236, 1.0
      %v240 = vmul.f32 %v228, 2.0
      %v241 = vmul.f32 %v229, 2.0
      %v242 = vmul.f32 %v230, 2.0
      %v243 = vmul.f32 %v237, %v237
      %v244 = vmul.f32 %v238, %v238
      %v245 = vmul.f32 %v239, %v239
      %v246 = vadd.f32 %v243, 1.0
      %v247 = vadd.f32 %v244, 1.0
      %v248 = vadd.f32 %v245, 1.0
      %v249 = vrcp.pop %v246
      %v250 = vmul.f32 %v246, %v249
      %v251 = vsub.f32 1.0, %v250
      %v252 = vmul.f32 %v249, %v251
      %v253 = vadd.f32 %v249, %v252
      %vm254 = vweird.f32 %v246
      %vm255 = vweird.f32 %v249
      %vm256 = vmor %vm254, %vm255
      %v257 = vsel %vm256, %v249, %v253
      %v258 = vand.u32 2147483647, %v246
      %vm259 = vcmp.eq.f32.partialorder %v258, 8.507059e+37
      %v260 = vand.u32 %v246, 2147483648
      %v261 = vor.u32 1.1754944e-38, %v260
      %v262 = vsel %vm259, %v261, %v257
      %v263 = vmul.f32 %v240, %v262
      %v264 = vrcp.pop %v247
      %v265 = vmul.f32 %v247, %v264
      %v266 = vsub.f32 1.0, %v265
      %v267 = vmul.f32 %v264, %v266
      %v268 = vadd.f32 %v264, %v267
      %vm269 = vweird.f32 %v247
      %vm270 = vweird.f32 %v264
      %vm271 = vmor %vm269, %vm270
      %v272 = vsel %vm271, %v264, %v268
      %v273 = vand.u32 2147483647, %v247
      %vm274 = vcmp.eq.f32.partialorder %v273, 8.507059e+37
      %v275 = vand.u32 %v247, 2147483648
      %v276 = vor.u32 1.1754944e-38, %v275
      %v277 = vsel %vm274, %v276, %v272
      %v278 = vmul.f32 %v241, %v277
      %v279 = vrcp.pop %v248
      %v280 = vmul.f32 %v248, %v279
      %v281 = vsub.f32 1.0, %v280
      %v282 = vmul.f32 %v279, %v281
      %v283 = vadd.f32 %v279, %v282
      %vm284 = vweird.f32 %v248
      %vm285 = vweird.f32 %v279
      %vm286 = vmor %vm284, %vm285
      %v287 = vsel %vm286, %v279, %v283
      %v288 = vand.u32 2147483647, %v248
      %vm289 = vcmp.eq.f32.partialorder %v288, 8.507059e+37
      %v290 = vand.u32 %v248, 2147483648
      %v291 = vor.u32 1.1754944e-38, %v290
      %v292 = vsel %vm289, %v291, %v287
      %v293 = vmul.f32 %v242, %v292
      %v294 = vsub.f32 %v228, %v263
      %v295 = vsub.f32 %v229, %v278
      %v296 = vsub.f32 %v230, %v293
      %v297 = vld [vmem:[%s1] sm:$0xff]
      %298 = vrot.lane.b32.xlu0 %v294, 127
      %v299 = vpop.permute.xlu0 %298
      %300 = vrot.lane.b32.xlu0 %v295, 127
      %v301 = vpop.permute.xlu0 %300
      %302 = vrot.lane.b32.xlu0 %v296, 127
      %v303 = vpop.permute.xlu0 %302
      %v304 = vlaneseq
      %v305 = vand.u32 %v304, 127
      %vm306 = vcmp.lt.s32.totalorder %v305, 127
      %v307 = vsel %vm306, %v301, %v303
      %v308 = vsel %vm306, %v299, %v301
      %v309 = vsel %vm306, %v303, %v299
      %v310 = vld [vmem:[%s1 + $0x8] sm:$0xff]
      %vm311 = vcmask 64512
      %v313 = vsel %vm311, %v310, 0
      %315 = vmatpush.msra.mxu0 0.0
      %316 = vmatpush.msra.mxu0 0.0
      %317 = vmatpush.msra.mxu0 0.0
      %318 = vmatpush.msra.mxu0 0.0
      %319 = vmatpush.msra.mxu0 0.0
      %320 = vmatpush.msra.mxu0 0.0
      %321 = vmatpush.msra.mxu0 0.0
      %322 = vmatpush.msra.mxu0 0.0
      %323 = vmatpush.msra.mxu0 0.0
      %324 = vmatpush.msra.mxu0 0.0
      %325 = vmatpush.msra.mxu0 0.0
      %326 = vmatpush.msra.mxu0 0.0
      %327 = vmatpush.msra.mxu0 0.0
      %328 = vmatpush.msra.mxu0 0.0
      %329 = vmatpush.msra.mxu0 0.0
      %330 = vmatpush.msra.mxu0 %v308
      %331 = vmatmul.f32.gmra.mxu0 %v313
      %v332 = vpop.f32.mrf.mxu0
      %v333 = vadd.f32 0.0, %v332
      %334 = vdwg.mxu0
      %335 = vmatpush.msra.mxu0 0.0
      %336 = vmatpush.msra.mxu0 0.0
      %337 = vmatpush.msra.mxu0 0.0
      %338 = vmatpush.msra.mxu0 0.0
      %339 = vmatpush.msra.mxu0 0.0
      %340 = vmatpush.msra.mxu0 0.0
      %341 = vmatpush.msra.mxu0 0.0
      %342 = vmatpush.msra.mxu0 0.0
      %343 = vmatpush.msra.mxu0 0.0
      %344 = vmatpush.msra.mxu0 0.0
      %345 = vmatpush.msra.mxu0 0.0
      %346 = vmatpush.msra.mxu0 0.0
      %347 = vmatpush.msra.mxu0 0.0
      %348 = vmatpush.msra.mxu0 0.0
      %349 = vmatpush.msra.mxu0 0.0
      %350 = vmatpush.msra.mxu0 %v307
      %351 = vmatmul.f32.gmra.mxu0 %v313
      %v352 = vpop.f32.mrf.mxu0
      %v353 = vadd.f32 0.0, %v352
      %354 = vdwg.mxu0
      %355 = vmatpush.msra.mxu0 0.0
      %356 = vmatpush.msra.mxu0 0.0
      %357 = vmatpush.msra.mxu0 0.0
      %358 = vmatpush.msra.mxu0 0.0
      %359 = vmatpush.msra.mxu0 0.0
      %360 = vmatpush.msra.mxu0 0.0
      %361 = vmatpush.msra.mxu0 0.0
      %362 = vmatpush.msra.mxu0 0.0
      %363 = vmatpush.msra.mxu0 0.0
      %364 = vmatpush.msra.mxu0 0.0
      %365 = vmatpush.msra.mxu0 0.0
      %366 = vmatpush.msra.mxu0 0.0
      %367 = vmatpush.msra.mxu0 0.0
      %368 = vmatpush.msra.mxu0 0.0
      %369 = vmatpush.msra.mxu0 0.0
      %370 = vmatpush.msra.mxu0 %v309
      %371 = vmatmul.f32.gmra.mxu0 %v313
      %v372 = vpop.f32.mrf.mxu0
      %v373 = vadd.f32 0.0, %v372
      %374 = vdwg.mxu0
      %v376 = vsel %vm311, %v297, 0
      %378 = vmatpush.msra.mxu0 0.0
      %379 = vmatpush.msra.mxu0 0.0
      %380 = vmatpush.msra.mxu0 0.0
      %381 = vmatpush.msra.mxu0 0.0
      %382 = vmatpush.msra.mxu0 0.0
      %383 = vmatpush.msra.mxu0 0.0
      %384 = vmatpush.msra.mxu0 0.0
      %385 = vmatpush.msra.mxu0 0.0
      %386 = vmatpush.msra.mxu0 0.0
      %387 = vmatpush.msra.mxu0 0.0
      %388 = vmatpush.msra.mxu0 0.0
      %389 = vmatpush.msra.mxu0 0.0
      %390 = vmatpush.msra.mxu0 0.0
      %391 = vmatpush.msra.mxu0 0.0
      %392 = vmatpush.msra.mxu0 0.0
      %393 = vmatpush.msra.mxu0 %v294
      %394 = vmatmul.f32.gmra.mxu0 %v376
      %v395 = vpop.f32.mrf.mxu0
      %v396 = vadd.f32 %v333, %v395
      %397 = vdwg.mxu0
      %398 = vmatpush.msra.mxu0 0.0
      %399 = vmatpush.msra.mxu0 0.0
      %400 = vmatpush.msra.mxu0 0.0
      %401 = vmatpush.msra.mxu0 0.0
      %402 = vmatpush.msra.mxu0 0.0
      %403 = vmatpush.msra.mxu0 0.0
      %404 = vmatpush.msra.mxu0 0.0
      %405 = vmatpush.msra.mxu0 0.0
      %406 = vmatpush.msra.mxu0 0.0
      %407 = vmatpush.msra.mxu0 0.0
      %408 = vmatpush.msra.mxu0 0.0
      %409 = vmatpush.msra.mxu0 0.0
      %410 = vmatpush.msra.mxu0 0.0
      %411 = vmatpush.msra.mxu0 0.0
      %412 = vmatpush.msra.mxu0 0.0
      %413 = vmatpush.msra.mxu0 %v295
      %414 = vmatmul.f32.gmra.mxu0 %v376
      %v415 = vpop.f32.mrf.mxu0
      %v416 = vadd.f32 %v353, %v415
      %417 = vdwg.mxu0
      %418 = vmatpush.msra.mxu0 0.0
      %419 = vmatpush.msra.mxu0 0.0
      %420 = vmatpush.msra.mxu0 0.0
      %421 = vmatpush.msra.mxu0 0.0
      %422 = vmatpush.msra.mxu0 0.0
      %423 = vmatpush.msra.mxu0 0.0
      %424 = vmatpush.msra.mxu0 0.0
      %425 = vmatpush.msra.mxu0 0.0
      %426 = vmatpush.msra.mxu0 0.0
      %427 = vmatpush.msra.mxu0 0.0
      %428 = vmatpush.msra.mxu0 0.0
      %429 = vmatpush.msra.mxu0 0.0
      %430 = vmatpush.msra.mxu0 0.0
      %431 = vmatpush.msra.mxu0 0.0
      %432 = vmatpush.msra.mxu0 0.0
      %433 = vmatpush.msra.mxu0 %v296
      %434 = vmatmul.f32.gmra.mxu0 %v376
      %v435 = vpop.f32.mrf.mxu0
      %v436 = vadd.f32 %v373, %v435
      %437 = vdwg.mxu0
      %438 = vrot.lane.b32.xlu0 %v294, 110
      %v439 = vpop.permute.xlu0 %438
      %440 = vrot.lane.b32.xlu0 %v295, 110
      %v441 = vpop.permute.xlu0 %440
      %442 = vrot.lane.b32.xlu0 %v296, 110
      %v443 = vpop.permute.xlu0 %442
      %vm444 = vcmp.lt.s32.totalorder %v305, 110
      %v445 = vsel %vm444, %v441, %v443
      %v446 = vsel %vm444, %v439, %v441
      %v447 = vsel %vm444, %v443, %v439
      %v448 = vld [vmem:[%s1 + $0x10] sm:$0xff]
      %v450 = vsel %vm311, %v448, 0
      %452 = vmatpush.msra.mxu0 0.0
      %453 = vmatpush.msra.mxu0 0.0
      %454 = vmatpush.msra.mxu0 0.0
      %455 = vmatpush.msra.mxu0 0.0
      %456 = vmatpush.msra.mxu0 0.0
      %457 = vmatpush.msra.mxu0 0.0
      %458 = vmatpush.msra.mxu0 0.0
      %459 = vmatpush.msra.mxu0 0.0
      %460 = vmatpush.msra.mxu0 0.0
      %461 = vmatpush.msra.mxu0 0.0
      %462 = vmatpush.msra.mxu0 0.0
      %463 = vmatpush.msra.mxu0 0.0
      %464 = vmatpush.msra.mxu0 0.0
      %465 = vmatpush.msra.mxu0 0.0
      %466 = vmatpush.msra.mxu0 0.0
      %467 = vmatpush.msra.mxu0 %v446
      %468 = vmatmul.f32.gmra.mxu0 %v450
      %v469 = vpop.f32.mrf.mxu0
      %v470 = vadd.f32 0.0, %v469
      %471 = vdwg.mxu0
      %472 = vmatpush.msra.mxu0 0.0
      %473 = vmatpush.msra.mxu0 0.0
      %474 = vmatpush.msra.mxu0 0.0
      %475 = vmatpush.msra.mxu0 0.0
      %476 = vmatpush.msra.mxu0 0.0
      %477 = vmatpush.msra.mxu0 0.0
      %478 = vmatpush.msra.mxu0 0.0
      %479 = vmatpush.msra.mxu0 0.0
      %480 = vmatpush.msra.mxu0 0.0
      %481 = vmatpush.msra.mxu0 0.0
      %482 = vmatpush.msra.mxu0 0.0
      %483 = vmatpush.msra.mxu0 0.0
      %484 = vmatpush.msra.mxu0 0.0
      %485 = vmatpush.msra.mxu0 0.0
      %486 = vmatpush.msra.mxu0 0.0
      %487 = vmatpush.msra.mxu0 %v445
      %488 = vmatmul.f32.gmra.mxu0 %v450
      %v489 = vpop.f32.mrf.mxu0
      %v490 = vadd.f32 0.0, %v489
      %491 = vdwg.mxu0
      %492 = vmatpush.msra.mxu0 0.0
      %493 = vmatpush.msra.mxu0 0.0
      %494 = vmatpush.msra.mxu0 0.0
      %495 = vmatpush.msra.mxu0 0.0
      %496 = vmatpush.msra.mxu0 0.0
      %497 = vmatpush.msra.mxu0 0.0
      %498 = vmatpush.msra.mxu0 0.0
      %499 = vmatpush.msra.mxu0 0.0
      %500 = vmatpush.msra.mxu0 0.0
      %501 = vmatpush.msra.mxu0 0.0
      %502 = vmatpush.msra.mxu0 0.0
      %503 = vmatpush.msra.mxu0 0.0
      %504 = vmatpush.msra.mxu0 0.0
      %505 = vmatpush.msra.mxu0 0.0
      %506 = vmatpush.msra.mxu0 0.0
      %507 = vmatpush.msra.mxu0 %v447
      %508 = vmatmul.f32.gmra.mxu0 %v450
      %v509 = vpop.f32.mrf.mxu0
      %v510 = vadd.f32 0.0, %v509
      %511 = vdwg.mxu0
      %v512 = vadd.f32 %v396, %v470
      %v513 = vadd.f32 %v416, %v490
      %v514 = vadd.f32 %v436, %v510
      %515 = vrot.lane.b32.xlu0 %v294, 109
      %v516 = vpop.permute.xlu0 %515
      %517 = vrot.lane.b32.xlu0 %v295, 109
      %v518 = vpop.permute.xlu0 %517
      %519 = vrot.lane.b32.xlu0 %v296, 109
      %v520 = vpop.permute.xlu0 %519
      %vm521 = vcmp.lt.s32.totalorder %v305, 109
      %v522 = vsel %vm521, %v518, %v520
      %v523 = vsel %vm521, %v516, %v518
      %v524 = vsel %vm521, %v520, %v516
      %v525 = vld [vmem:[%s1 + $0x18] sm:$0xff]
      %v527 = vsel %vm311, %v525, 0
      %529 = vmatpush.msra.mxu0 0.0
      %530 = vmatpush.msra.mxu0 0.0
      %531 = vmatpush.msra.mxu0 0.0
      %532 = vmatpush.msra.mxu0 0.0
      %533 = vmatpush.msra.mxu0 0.0
      %534 = vmatpush.msra.mxu0 0.0
      %535 = vmatpush.msra.mxu0 0.0
      %536 = vmatpush.msra.mxu0 0.0
      %537 = vmatpush.msra.mxu0 0.0
      %538 = vmatpush.msra.mxu0 0.0
      %539 = vmatpush.msra.mxu0 0.0
      %540 = vmatpush.msra.mxu0 0.0
      %541 = vmatpush.msra.mxu0 0.0
      %542 = vmatpush.msra.mxu0 0.0
      %543 = vmatpush.msra.mxu0 0.0
      %544 = vmatpush.msra.mxu0 %v523
      %545 = vmatmul.f32.gmra.mxu0 %v527
      %v546 = vpop.f32.mrf.mxu0
      %v547 = vadd.f32 0.0, %v546
      %548 = vdwg.mxu0
      %549 = vmatpush.msra.mxu0 0.0
      %550 = vmatpush.msra.mxu0 0.0
      %551 = vmatpush.msra.mxu0 0.0
      %552 = vmatpush.msra.mxu0 0.0
      %553 = vmatpush.msra.mxu0 0.0
      %554 = vmatpush.msra.mxu0 0.0
      %555 = vmatpush.msra.mxu0 0.0
      %556 = vmatpush.msra.mxu0 0.0
      %557 = vmatpush.msra.mxu0 0.0
      %558 = vmatpush.msra.mxu0 0.0
      %559 = vmatpush.msra.mxu0 0.0
      %560 = vmatpush.msra.mxu0 0.0
      %561 = vmatpush.msra.mxu0 0.0
      %562 = vmatpush.msra.mxu0 0.0
      %563 = vmatpush.msra.mxu0 0.0
      %564 = vmatpush.msra.mxu0 %v522
      %565 = vmatmul.f32.gmra.mxu0 %v527
      %v566 = vpop.f32.mrf.mxu0
      %v567 = vadd.f32 0.0, %v566
      %568 = vdwg.mxu0
      %569 = vmatpush.msra.mxu0 0.0
      %570 = vmatpush.msra.mxu0 0.0
      %571 = vmatpush.msra.mxu0 0.0
      %572 = vmatpush.msra.mxu0 0.0
      %573 = vmatpush.msra.mxu0 0.0
      %574 = vmatpush.msra.mxu0 0.0
      %575 = vmatpush.msra.mxu0 0.0
      %576 = vmatpush.msra.mxu0 0.0
      %577 = vmatpush.msra.mxu0 0.0
      %578 = vmatpush.msra.mxu0 0.0
      %579 = vmatpush.msra.mxu0 0.0
      %580 = vmatpush.msra.mxu0 0.0
      %581 = vmatpush.msra.mxu0 0.0
      %582 = vmatpush.msra.mxu0 0.0
      %583 = vmatpush.msra.mxu0 0.0
      %584 = vmatpush.msra.mxu0 %v524
      %585 = vmatmul.f32.gmra.mxu0 %v527
      %v586 = vpop.f32.mrf.mxu0
      %v587 = vadd.f32 0.0, %v586
      %588 = vdwg.mxu0
      %v589 = vadd.f32 %v512, %v547
      %v590 = vadd.f32 %v513, %v567
      %v591 = vadd.f32 %v514, %v587
      %v592 = vld [vmem:[%s2] sm:$0xff]
      %594 = vset.pattern.permute.xlu0 0
      %595 = vperm.xlu0 %594, %v592
      %v596 = vpop.permute.xlu0 %595
      %v598 = vadd.f32 %v589, %v596
      %v599 = vadd.f32 %v590, %v596
      %v600 = vadd.f32 %v591, %v596
      %v601 = vmul.f32 %v598, 1.442695
      %v602 = vpow.pop %v601
      %v603 = vmul.f32 %v599, 1.442695
      %v604 = vpow.pop %v603
      %v605 = vmul.f32 %v600, 1.442695
      %v606 = vpow.pop %v605
      %v607 = vadd.f32 %v602, 1.0
      %v608 = vadd.f32 %v604, 1.0
      %v609 = vadd.f32 %v606, 1.0
      %v610 = vmul.f32 %v598, 2.0
      %v611 = vmul.f32 %v599, 2.0
      %v612 = vmul.f32 %v600, 2.0
      %v613 = vmul.f32 %v607, %v607
      %v614 = vmul.f32 %v608, %v608
      %v615 = vmul.f32 %v609, %v609
      %v616 = vadd.f32 %v613, 1.0
      %v617 = vadd.f32 %v614, 1.0
      %v618 = vadd.f32 %v615, 1.0
      %v619 = vrcp.pop %v616
      %v620 = vmul.f32 %v616, %v619
      %v621 = vsub.f32 1.0, %v620
      %v622 = vmul.f32 %v619, %v621
      %v623 = vadd.f32 %v619, %v622
      %vm624 = vweird.f32 %v616
      %vm625 = vweird.f32 %v619
      %vm626 = vmor %vm624, %vm625
      %v627 = vsel %vm626, %v619, %v623
      %v628 = vand.u32 2147483647, %v616
      %vm629 = vcmp.eq.f32.partialorder %v628, 8.507059e+37
      %v630 = vand.u32 %v616, 2147483648
      %v631 = vor.u32 1.1754944e-38, %v630
      %v632 = vsel %vm629, %v631, %v627
      %v633 = vmul.f32 %v610, %v632
      %v634 = vrcp.pop %v617
      %v635 = vmul.f32 %v617, %v634
      %v636 = vsub.f32 1.0, %v635
      %v637 = vmul.f32 %v634, %v636
      %v638 = vadd.f32 %v634, %v637
      %vm639 = vweird.f32 %v617
      %vm640 = vweird.f32 %v634
      %vm641 = vmor %vm639, %vm640
      %v642 = vsel %vm641, %v634, %v638
      %v643 = vand.u32 2147483647, %v617
      %vm644 = vcmp.eq.f32.partialorder %v643, 8.507059e+37
      %v645 = vand.u32 %v617, 2147483648
      %v646 = vor.u32 1.1754944e-38, %v645
      %v647 = vsel %vm644, %v646, %v642
      %v648 = vmul.f32 %v611, %v647
      %v649 = vrcp.pop %v618
      %v650 = vmul.f32 %v618, %v649
      %v651 = vsub.f32 1.0, %v650
      %v652 = vmul.f32 %v649, %v651
      %v653 = vadd.f32 %v649, %v652
      %vm654 = vweird.f32 %v618
      %vm655 = vweird.f32 %v649
      %vm656 = vmor %vm654, %vm655
      %v657 = vsel %vm656, %v649, %v653
      %v658 = vand.u32 2147483647, %v618
      %vm659 = vcmp.eq.f32.partialorder %v658, 8.507059e+37
      %v660 = vand.u32 %v618, 2147483648
      %v661 = vor.u32 1.1754944e-38, %v660
      %v662 = vsel %vm659, %v661, %v657
      %v663 = vmul.f32 %v612, %v662
      %v664 = vsub.f32 %v598, %v633
      %v665 = vsub.f32 %v599, %v648
      %v666 = vsub.f32 %v600, %v663
      %v667 = vld [vmem:[%s3] sm:$0xff]
      %668 = vrot.lane.b32.xlu0 %v664, 127
      %v669 = vpop.permute.xlu0 %668
      %670 = vrot.lane.b32.xlu0 %v665, 127
      %v671 = vpop.permute.xlu0 %670
      %672 = vrot.lane.b32.xlu0 %v666, 127
      %v673 = vpop.permute.xlu0 %672
      %v674 = vsel %vm306, %v671, %v673
      %v675 = vsel %vm306, %v669, %v671
      %v676 = vsel %vm306, %v673, %v669
      %v677 = vld [vmem:[%s3 + $0x8] sm:$0xff]
      %v679 = vsel %vm311, %v677, 0
      %681 = vmatpush.msra.mxu0 0.0
      %682 = vmatpush.msra.mxu0 0.0
      %683 = vmatpush.msra.mxu0 0.0
      %684 = vmatpush.msra.mxu0 0.0
      %685 = vmatpush.msra.mxu0 0.0
      %686 = vmatpush.msra.mxu0 0.0
      %687 = vmatpush.msra.mxu0 0.0
      %688 = vmatpush.msra.mxu0 0.0
      %689 = vmatpush.msra.mxu0 0.0
      %690 = vmatpush.msra.mxu0 0.0
      %691 = vmatpush.msra.mxu0 0.0
      %692 = vmatpush.msra.mxu0 0.0
      %693 = vmatpush.msra.mxu0 0.0
      %694 = vmatpush.msra.mxu0 0.0
      %695 = vmatpush.msra.mxu0 0.0
      %696 = vmatpush.msra.mxu0 %v675
      %697 = vmatmul.f32.gmra.mxu0 %v679
      %v698 = vpop.f32.mrf.mxu0
      %v699 = vadd.f32 0.0, %v698
      %700 = vdwg.mxu0
      %701 = vmatpush.msra.mxu0 0.0
      %702 = vmatpush.msra.mxu0 0.0
      %703 = vmatpush.msra.mxu0 0.0
      %704 = vmatpush.msra.mxu0 0.0
      %705 = vmatpush.msra.mxu0 0.0
      %706 = vmatpush.msra.mxu0 0.0
      %707 = vmatpush.msra.mxu0 0.0
      %708 = vmatpush.msra.mxu0 0.0
      %709 = vmatpush.msra.mxu0 0.0
      %710 = vmatpush.msra.mxu0 0.0
      %711 = vmatpush.msra.mxu0 0.0
      %712 = vmatpush.msra.mxu0 0.0
      %713 = vmatpush.msra.mxu0 0.0
      %714 = vmatpush.msra.mxu0 0.0
      %715 = vmatpush.msra.mxu0 0.0
      %716 = vmatpush.msra.mxu0 %v674
      %717 = vmatmul.f32.gmra.mxu0 %v679
      %v718 = vpop.f32.mrf.mxu0
      %v719 = vadd.f32 0.0, %v718
      %720 = vdwg.mxu0
      %721 = vmatpush.msra.mxu0 0.0
      %722 = vmatpush.msra.mxu0 0.0
      %723 = vmatpush.msra.mxu0 0.0
      %724 = vmatpush.msra.mxu0 0.0
      %725 = vmatpush.msra.mxu0 0.0
      %726 = vmatpush.msra.mxu0 0.0
      %727 = vmatpush.msra.mxu0 0.0
      %728 = vmatpush.msra.mxu0 0.0
      %729 = vmatpush.msra.mxu0 0.0
      %730 = vmatpush.msra.mxu0 0.0
      %731 = vmatpush.msra.mxu0 0.0
      %732 = vmatpush.msra.mxu0 0.0
      %733 = vmatpush.msra.mxu0 0.0
      %734 = vmatpush.msra.mxu0 0.0
      %735 = vmatpush.msra.mxu0 0.0
      %736 = vmatpush.msra.mxu0 %v676
      %737 = vmatmul.f32.gmra.mxu0 %v679
      %v738 = vpop.f32.mrf.mxu0
      %v739 = vadd.f32 0.0, %v738
      %740 = vdwg.mxu0
      %v742 = vsel %vm311, %v667, 0
      %744 = vmatpush.msra.mxu0 0.0
      %745 = vmatpush.msra.mxu0 0.0
      %746 = vmatpush.msra.mxu0 0.0
      %747 = vmatpush.msra.mxu0 0.0
      %748 = vmatpush.msra.mxu0 0.0
      %749 = vmatpush.msra.mxu0 0.0
      %750 = vmatpush.msra.mxu0 0.0
      %751 = vmatpush.msra.mxu0 0.0
      %752 = vmatpush.msra.mxu0 0.0
      %753 = vmatpush.msra.mxu0 0.0
      %754 = vmatpush.msra.mxu0 0.0
      %755 = vmatpush.msra.mxu0 0.0
      %756 = vmatpush.msra.mxu0 0.0
      %757 = vmatpush.msra.mxu0 0.0
      %758 = vmatpush.msra.mxu0 0.0
      %759 = vmatpush.msra.mxu0 %v664
      %760 = vmatmul.f32.gmra.mxu0 %v742
      %v761 = vpop.f32.mrf.mxu0
      %v762 = vadd.f32 %v699, %v761
      %763 = vdwg.mxu0
      %764 = vmatpush.msra.mxu0 0.0
      %765 = vmatpush.msra.mxu0 0.0
      %766 = vmatpush.msra.mxu0 0.0
      %767 = vmatpush.msra.mxu0 0.0
      %768 = vmatpush.msra.mxu0 0.0
      %769 = vmatpush.msra.mxu0 0.0
      %770 = vmatpush.msra.mxu0 0.0
      %771 = vmatpush.msra.mxu0 0.0
      %772 = vmatpush.msra.mxu0 0.0
      %773 = vmatpush.msra.mxu0 0.0
      %774 = vmatpush.msra.mxu0 0.0
      %775 = vmatpush.msra.mxu0 0.0
      %776 = vmatpush.msra.mxu0 0.0
      %777 = vmatpush.msra.mxu0 0.0
      %778 = vmatpush.msra.mxu0 0.0
      %779 = vmatpush.msra.mxu0 %v665
      %780 = vmatmul.f32.gmra.mxu0 %v742
      %v781 = vpop.f32.mrf.mxu0
      %v782 = vadd.f32 %v719, %v781
      %783 = vdwg.mxu0
      %784 = vmatpush.msra.mxu0 0.0
      %785 = vmatpush.msra.mxu0 0.0
      %786 = vmatpush.msra.mxu0 0.0
      %787 = vmatpush.msra.mxu0 0.0
      %788 = vmatpush.msra.mxu0 0.0
      %789 = vmatpush.msra.mxu0 0.0
      %790 = vmatpush.msra.mxu0 0.0
      %791 = vmatpush.msra.mxu0 0.0
      %792 = vmatpush.msra.mxu0 0.0
      %793 = vmatpush.msra.mxu0 0.0
      %794 = vmatpush.msra.mxu0 0.0
      %795 = vmatpush.msra.mxu0 0.0
      %796 = vmatpush.msra.mxu0 0.0
      %797 = vmatpush.msra.mxu0 0.0
      %798 = vmatpush.msra.mxu0 0.0
      %799 = vmatpush.msra.mxu0 %v666
      %800 = vmatmul.f32.gmra.mxu0 %v742
      %v801 = vpop.f32.mrf.mxu0
      %v802 = vadd.f32 %v739, %v801
      %803 = vdwg.mxu0
      %804 = vrot.lane.b32.xlu0 %v664, 110
      %v805 = vpop.permute.xlu0 %804
      %806 = vrot.lane.b32.xlu0 %v665, 110
      %v807 = vpop.permute.xlu0 %806
      %808 = vrot.lane.b32.xlu0 %v666, 110
      %v809 = vpop.permute.xlu0 %808
      %v810 = vsel %vm444, %v807, %v809
      %v811 = vsel %vm444, %v805, %v807
      %v812 = vsel %vm444, %v809, %v805
      %v813 = vld [vmem:[%s3 + $0x10] sm:$0xff]
      %v815 = vsel %vm311, %v813, 0
      %817 = vmatpush.msra.mxu0 0.0
      %818 = vmatpush.msra.mxu0 0.0
      %819 = vmatpush.msra.mxu0 0.0
      %820 = vmatpush.msra.mxu0 0.0
      %821 = vmatpush.msra.mxu0 0.0
      %822 = vmatpush.msra.mxu0 0.0
      %823 = vmatpush.msra.mxu0 0.0
      %824 = vmatpush.msra.mxu0 0.0
      %825 = vmatpush.msra.mxu0 0.0
      %826 = vmatpush.msra.mxu0 0.0
      %827 = vmatpush.msra.mxu0 0.0
      %828 = vmatpush.msra.mxu0 0.0
      %829 = vmatpush.msra.mxu0 0.0
      %830 = vmatpush.msra.mxu0 0.0
      %831 = vmatpush.msra.mxu0 0.0
      %832 = vmatpush.msra.mxu0 %v811
      %833 = vmatmul.f32.gmra.mxu0 %v815
      %v834 = vpop.f32.mrf.mxu0
      %v835 = vadd.f32 0.0, %v834
      %836 = vdwg.mxu0
      %837 = vmatpush.msra.mxu0 0.0
      %838 = vmatpush.msra.mxu0 0.0
      %839 = vmatpush.msra.mxu0 0.0
      %840 = vmatpush.msra.mxu0 0.0
      %841 = vmatpush.msra.mxu0 0.0
      %842 = vmatpush.msra.mxu0 0.0
      %843 = vmatpush.msra.mxu0 0.0
      %844 = vmatpush.msra.mxu0 0.0
      %845 = vmatpush.msra.mxu0 0.0
      %846 = vmatpush.msra.mxu0 0.0
      %847 = vmatpush.msra.mxu0 0.0
      %848 = vmatpush.msra.mxu0 0.0
      %849 = vmatpush.msra.mxu0 0.0
      %850 = vmatpush.msra.mxu0 0.0
      %851 = vmatpush.msra.mxu0 0.0
      %852 = vmatpush.msra.mxu0 %v810
      %853 = vmatmul.f32.gmra.mxu0 %v815
      %v854 = vpop.f32.mrf.mxu0
      %v855 = vadd.f32 0.0, %v854
      %856 = vdwg.mxu0
      %857 = vmatpush.msra.mxu0 0.0
      %858 = vmatpush.msra.mxu0 0.0
      %859 = vmatpush.msra.mxu0 0.0
      %860 = vmatpush.msra.mxu0 0.0
      %861 = vmatpush.msra.mxu0 0.0
      %862 = vmatpush.msra.mxu0 0.0
      %863 = vmatpush.msra.mxu0 0.0
      %864 = vmatpush.msra.mxu0 0.0
      %865 = vmatpush.msra.mxu0 0.0
      %866 = vmatpush.msra.mxu0 0.0
      %867 = vmatpush.msra.mxu0 0.0
      %868 = vmatpush.msra.mxu0 0.0
      %869 = vmatpush.msra.mxu0 0.0
      %870 = vmatpush.msra.mxu0 0.0
      %871 = vmatpush.msra.mxu0 0.0
      %872 = vmatpush.msra.mxu0 %v812
      %873 = vmatmul.f32.gmra.mxu0 %v815
      %v874 = vpop.f32.mrf.mxu0
      %v875 = vadd.f32 0.0, %v874
      %876 = vdwg.mxu0
      %v877 = vadd.f32 %v762, %v835
      %v878 = vadd.f32 %v782, %v855
      %v879 = vadd.f32 %v802, %v875
      %880 = vrot.lane.b32.xlu0 %v664, 109
      %v881 = vpop.permute.xlu0 %880
      %882 = vrot.lane.b32.xlu0 %v665, 109
      %v883 = vpop.permute.xlu0 %882
      %884 = vrot.lane.b32.xlu0 %v666, 109
      %v885 = vpop.permute.xlu0 %884
      %v886 = vsel %vm521, %v883, %v885
      %v887 = vsel %vm521, %v881, %v883
      %v888 = vsel %vm521, %v885, %v881
      %v889 = vld [vmem:[%s3 + $0x18] sm:$0xff]
      %v891 = vsel %vm311, %v889, 0
      %893 = vmatpush.msra.mxu0 0.0
      %894 = vmatpush.msra.mxu0 0.0
      %895 = vmatpush.msra.mxu0 0.0
      %896 = vmatpush.msra.mxu0 0.0
      %897 = vmatpush.msra.mxu0 0.0
      %898 = vmatpush.msra.mxu0 0.0
      %899 = vmatpush.msra.mxu0 0.0
      %900 = vmatpush.msra.mxu0 0.0
      %901 = vmatpush.msra.mxu0 0.0
      %902 = vmatpush.msra.mxu0 0.0
      %903 = vmatpush.msra.mxu0 0.0
      %904 = vmatpush.msra.mxu0 0.0
      %905 = vmatpush.msra.mxu0 0.0
      %906 = vmatpush.msra.mxu0 0.0
      %907 = vmatpush.msra.mxu0 0.0
      %908 = vmatpush.msra.mxu0 %v887
      %909 = vmatmul.f32.gmra.mxu0 %v891
      %v910 = vpop.f32.mrf.mxu0
      %v911 = vadd.f32 0.0, %v910
      %912 = vdwg.mxu0
      %913 = vmatpush.msra.mxu0 0.0
      %914 = vmatpush.msra.mxu0 0.0
      %915 = vmatpush.msra.mxu0 0.0
      %916 = vmatpush.msra.mxu0 0.0
      %917 = vmatpush.msra.mxu0 0.0
      %918 = vmatpush.msra.mxu0 0.0
      %919 = vmatpush.msra.mxu0 0.0
      %920 = vmatpush.msra.mxu0 0.0
      %921 = vmatpush.msra.mxu0 0.0
      %922 = vmatpush.msra.mxu0 0.0
      %923 = vmatpush.msra.mxu0 0.0
      %924 = vmatpush.msra.mxu0 0.0
      %925 = vmatpush.msra.mxu0 0.0
      %926 = vmatpush.msra.mxu0 0.0
      %927 = vmatpush.msra.mxu0 0.0
      %928 = vmatpush.msra.mxu0 %v886
      %929 = vmatmul.f32.gmra.mxu0 %v891
      %v930 = vpop.f32.mrf.mxu0
      %v931 = vadd.f32 0.0, %v930
      %932 = vdwg.mxu0
      %933 = vmatpush.msra.mxu0 0.0
      %934 = vmatpush.msra.mxu0 0.0
      %935 = vmatpush.msra.mxu0 0.0
      %936 = vmatpush.msra.mxu0 0.0
      %937 = vmatpush.msra.mxu0 0.0
      %938 = vmatpush.msra.mxu0 0.0
      %939 = vmatpush.msra.mxu0 0.0
      %940 = vmatpush.msra.mxu0 0.0
      %941 = vmatpush.msra.mxu0 0.0
      %942 = vmatpush.msra.mxu0 0.0
      %943 = vmatpush.msra.mxu0 0.0
      %944 = vmatpush.msra.mxu0 0.0
      %945 = vmatpush.msra.mxu0 0.0
      %946 = vmatpush.msra.mxu0 0.0
      %947 = vmatpush.msra.mxu0 0.0
      %948 = vmatpush.msra.mxu0 %v888
      %949 = vmatmul.f32.gmra.mxu0 %v891
      %v950 = vpop.f32.mrf.mxu0
      %v951 = vadd.f32 0.0, %v950
      %952 = vdwg.mxu0
      %v953 = vadd.f32 %v877, %v911
      %v954 = vadd.f32 %v878, %v931
      %v955 = vadd.f32 %v879, %v951
      %v956 = vld [vmem:[%s4] sm:$0xff]
      %958 = vset.pattern.permute.xlu0 0
      %959 = vperm.xlu0 %958, %v956
      %v960 = vpop.permute.xlu0 %959
      %v962 = vadd.f32 %v953, %v960
      %v963 = vadd.f32 %v954, %v960
      %v964 = vadd.f32 %v955, %v960
      %965 = vrot.lane.b32.xlu0 %v228, 109
      %v966 = vpop.permute.xlu0 %965
      %967 = vrot.lane.b32.xlu0 %v229, 109
      %v968 = vpop.permute.xlu0 %967
      %969 = vrot.lane.b32.xlu0 %v230, 109
      %v970 = vpop.permute.xlu0 %969
      %v971 = vsel %vm521, %v968, %v970
      %v972 = vsel %vm521, %v966, %v968
      %v973 = vsel %vm521, %v970, %v966
      %v974 = vadd.f32 %v962, %v972
      %v975 = vadd.f32 %v963, %v971
      %v976 = vadd.f32 %v964, %v973
      %977 = vst [vmem:[%s226] sm:$0xff] %v974
      %978 = vst [vmem:[%s226 + $0x8] sm:$0xff] %v975
      %979 = vst [vmem:[%s226 + $0x10] sm:$0xff] %v976
      %s980 = smul.u32 3, %s16
      %p981 = scmp.lt.s32.totalorder %s980, 5
      %s982 = scalar_select %p981, %s980, 5
      %s983 = smul.addr %s982, 8
      %s984 = scalar_lea.vmem %s5, %s983
      // Predicated region
      $region41: #{residual_block_kn.1} parent=39 // pred_check
        %p985 = pneg %p144
      $region42: #{residual_block_kn.1} parent=39 // pred_check_branch
        %987 = sbr.rel (%p985) target = $region44
      $region43: #{residual_block_kn.1} parent=39 // pred_region
        %s988 = smul.u32 3, %s16
      $region44: #{residual_block_kn.1} parent=39 // pred_fallthru
        _
    $region40: #{residual_block_kn.1} parent=5 // pred_fallthru
      _
    %p989 = scmp.le.s32.totalorder 2, %s11
    // Predicated region
    $region45: #{residual_block_kn.1} parent=5 // pred_check
      %p990 = pneg %p989
    $region46: #{residual_block_kn.1} parent=5 // pred_check_branch
      %992 = sbr.rel (%p990) target = $region48
    $region47: #{residual_block_kn.1} parent=5 // pred_region
      %s993 = ssub.s32 %s11, 2
      // Predicated region
      $region49: #{residual_block_kn.1} parent=47 // pred_check
        %p994 = pneg %p150
      $region50: #{residual_block_kn.1} parent=47 // pred_check_branch
        %996 = sbr.rel (%p994) target = $region52
      $region51: #{residual_block_kn.1} parent=47 // pred_region
        %s997 = smul.u32 3, %s17
        %p998 = scmp.lt.s32.totalorder %s997, 5
        %s999 = scalar_select %p998, %s997, 5
        %s1000 = smul.addr %s999, 8
        %s1001 = scalar_lea.vmem %s5, %s1000
      $region52: #{residual_block_kn.1} parent=47 // pred_fallthru
        _
    $region48: #{residual_block_kn.1} parent=5 // pred_fallthru
      _
  $region6: #{residual_block_kn.1} parent=0 // loop_footer
    %s15 = sadd.s32 1, %s11
  $region7: #{residual_block_kn.1} parent=0 // loop_footer_branch
    %10 = sbr.rel target = $region3
  $region8: #{residual_block_kn.1} parent=0 // loop_exit
    _

</llo_original>
